<compile_context>
chip_gen: v5e
topology: v5e:2x2
jax: 0.10.0
libtpu: 0.0.40
codegen_flags: <defaults>
</compile_context>

<pallas_src>
import functools
import random

import numpy as np
import jax
import jax.numpy as jnp
from jax.experimental import pallas as pl
from jax.experimental.pallas import tpu as pltpu


def _round_up(x, m):
    return ((x + m - 1) // m) * m


# ---------------------------------------------------------------------------
# Kernel 1: normalize embedding tiles and compute a cosine-similarity tile.
# ---------------------------------------------------------------------------
def _sim_kernel(text_ref, label_ref, sim_ref, *, mxu_dtype):
    t = text_ref[...]                           # (TB, D_pad) f32
    l = label_ref[...]                          # (TL, D_pad) f32
    # F.normalize(p=2, dim=-1, eps=1e-12)  ==  x * rsqrt(max(sum(x*x), eps**2))
    tn = t * jax.lax.rsqrt(jnp.maximum(jnp.sum(t * t, axis=-1, keepdims=True), 1e-24))
    ln = l * jax.lax.rsqrt(jnp.maximum(jnp.sum(l * l, axis=-1, keepdims=True), 1e-24))
    # Cosine similarity of unit rows == tn @ ln^T.  Contract the last dims of both
    # operands directly so Mosaic feeds the MXU without an XLU transpose of the labels.
    sim_ref[...] = jax.lax.dot_general(
        tn.astype(mxu_dtype), ln.astype(mxu_dtype),
        dimension_numbers=(((1,), (1,)), ((), ())),
        preferred_element_type=jnp.float32)


def normalize_and_similarity(text_embeddings, label_embeddings, *, tb_max=256, tl_max=512):
    """Returns the padded (B_pad, L_pad) f32 cosine-similarity matrix (device-resident)."""
    B, D = text_embeddings.shape
    L, _ = label_embeddings.shape

    # Lane-dense padding: D (contraction) and L (output last dim) to x128, B to x8 sublanes.
    # Zero padding does not perturb norms or dot products.
    D_pad = _round_up(D, 128)
    TB = tb_max if B >= tb_max else _round_up(B, 8)
    TL = tl_max if L >= tl_max else _round_up(L, 128)
    B_pad = _round_up(B, TB)
    L_pad = _round_up(L, TL)

    # bf16 MXU operands when inputs are bf16 (v6e/v7x rate); exact f32 otherwise.
    mxu_dtype = jnp.bfloat16 if text_embeddings.dtype == jnp.bfloat16 else jnp.float32

    tp = jnp.pad(text_embeddings.astype(jnp.float32), ((0, B_pad - B), (0, D_pad - D)))
    lp = jnp.pad(label_embeddings.astype(jnp.float32), ((0, L_pad - L), (0, D_pad - D)))

    # TODO(synk): if D grows past a few thousand, tile D too with a VMEM accumulator on an
    # 'arbitrary' reduction axis (keeps tiles inside v7x's 32 MiB scoped VMEM).
    grid = (B_pad // TB, L_pad // TL)
    sim = pl.pallas_call(
        functools.partial(_sim_kernel, mxu_dtype=mxu_dtype),
        out_shape=jax.ShapeDtypeStruct((B_pad, L_pad), jnp.float32),
        grid_spec=pltpu.PrefetchScalarGridSpec(
            num_scalar_prefetch=0,
            grid=grid,
            in_specs=[
                pl.BlockSpec((TB, D_pad), lambda i, j: (i, 0)),
                pl.BlockSpec((TL, D_pad), lambda i, j: (j, 0)),
            ],
            out_specs=pl.BlockSpec((TB, TL), lambda i, j: (i, j)),
        ),
        compiler_params=pltpu.CompilerParams(
            dimension_semantics=("parallel", "parallel")),   # megacore-shardable on v7x
    )(tp, lp)
    return sim


# ---------------------------------------------------------------------------
# Kernel 2: one batched TripletMarginWithDistanceLoss over ALL levels,
#           distance = 1 - cosine, per-level 'mean' encoded in the weights.
# ---------------------------------------------------------------------------
def _triplet_kernel(sim_ref, aidx_ref, pidx_ref, nidx_ref, marg_ref, w_ref, out_ref):
    sim = sim_ref[...]                        # (B_pad, L_pad) f32  (unit-row dot products)
    a_idx = aidx_ref[...]                     # (T_pad, 1) int32  anchor -> batch row
    p_idx = pidx_ref[...]                     # (T_pad, 1) int32  positive -> label column
    n_idx = nidx_ref[...]                     # (T_pad, 1) int32  negative -> label column
    T = a_idx.shape[0]
    Bp, Lp = sim.shape

    # Row-gather sim[a_t, :] with a one-hot matmul (MXU) -- no dynamic gather needed.
    onehot_a = (jax.lax.broadcasted_iota(jnp.int32, (T, Bp), 1) == a_idx).astype(jnp.float32)
    rows = jax.lax.dot_general(onehot_a, sim, (((1,), (0,)), ((), ())),
                               preferred_element_type=jnp.float32)       # (T_pad, L_pad)

    # Column-select the positive / negative similarity per triplet (VPU + lane reduce).
    col = jax.lax.broadcasted_iota(jnp.int32, (T, Lp), 1)
    s_pos = jnp.sum(jnp.where(col == p_idx, rows, 0.0), axis=-1, keepdims=True)
    s_neg = jnp.sum(jnp.where(col == n_idx, rows, 0.0), axis=-1, keepdims=True)

    # d(x, y) = 1 - cosine(x, y); operands are unit rows of the normalized embeddings, so
    # cosine == dot == the sim entry (F.cosine_similarity re-normalization skipped: accepted
    # ~1e-7 approximation).  hinge = max[(1-s_pos) - (1-s_neg) + margin, 0].
    hinge = jnp.maximum(s_neg - s_pos + marg_ref[...], 0.0)

    # weights = 1/T_level for real triplets, 0 for padding rows  =>
    # sum == sum over levels of the per-level mean (matches 'mean' reduction + level sum).
    out_ref[...] = jnp.sum(hinge * w_ref[...], axis=0, keepdims=True)


def triplet_total_loss(sim, a_idx, p_idx, n_idx, margins, weights):
    T = len(a_idx)
    # Bucket T to max(8, next power of 2) so only a handful of shapes ever compile.
    T_pad = max(8, 1 << max(0, (T - 1).bit_length()))
    pad = T_pad - T

    def col(vals, dtype, fill=0):
        arr = np.asarray(list(vals) + [fill] * pad, dtype=dtype).reshape(T_pad, 1)
        return jnp.asarray(arr)

    a = col(a_idx, np.int32)
    p = col(p_idx, np.int32)
    n = col(n_idx, np.int32)
    m = col(margins, np.float32)
    w = col(weights, np.float32, fill=0.0)    # zero-weight padding rows (no mask input)

    out = pl.pallas_call(
        _triplet_kernel,
        out_shape=jax.ShapeDtypeStruct((1, 1), jnp.float32),
        in_specs=[pl.BlockSpec(memory_space=pltpu.MemorySpace.VMEM)] * 6,
        out_specs=pl.BlockSpec(memory_space=pltpu.MemorySpace.VMEM),
    )(sim, a, p, n, m, w)
    return out[0, 0]


# ---------------------------------------------------------------------------
# Module-level glue mirroring MarginSeparationLoss.forward.
# ---------------------------------------------------------------------------
class MarginSeparationLossPallas:
    def __init__(self, margin_list, level_label_indices):
        # TODO(synk): the reference loads level_dict.pt via torch.load; here the level dict
        # is passed in / synthesized deterministically in-script.
        self.margin_list = [float(m) for m in margin_list]
        self.level_indices_list = [
            list(level_label_indices[level]) for level in range(1, len(margin_list) + 1)
        ]

    def forward(self, text_embeddings, label_embeddings, target_labels):
        B, _ = text_embeddings.shape
        L, _ = label_embeddings.shape

        # Kernel 1: normalization + full cosine-similarity matrix (stays on device).
        sim_dev = normalize_and_similarity(text_embeddings, label_embeddings)

        # Host triplet mining mirrors the reference's Python control flow (nonzero/argmax,
        # host random.choice fallback, level-local negative-index behavior).  Only the tiny
        # (B, L) sim matrix crosses to the host; no embedding rows are transferred.
        sim_host = np.asarray(jax.device_get(sim_dev))[:B, :L]
        target = np.asarray(jax.device_get(target_labels))
        label_list = [list(np.nonzero(row)[0]) for row in target]

        a_idx, p_idx, n_idx, margins, weights = [], [], [], [], []
        for level_indices, margin in zip(self.level_indices_list, self.margin_list):
            level_set = set(int(i) for i in level_indices)
            index_to_label_map = {val: key for key, val in enumerate(level_indices)}
            level_sims_batch = sim_host[:, level_indices]              # (B, n_level)

            level_a, level_p, level_n = [], [], []
            for batch_idx, (label_ids, level_sims) in enumerate(
                    zip(label_list, level_sims_batch)):
                level_label_ids = [int(i) for i in label_ids if int(i) in level_set]
                for pos_id in level_label_ids:
                    pos_sim = level_sims[index_to_label_map[pos_id]]
                    indices = np.nonzero(level_sims > pos_sim)[0]
                    if len(indices) == 0:
                        neg_candidates = [idx for idx in level_indices if idx != pos_id]
                        neg_id = int(random.choice(neg_candidates))    # global label id
                    elif len(indices) > 1:
                        max_index = int(np.argmax(level_sims[indices]))
                        neg_id = int(indices[max_index])   # level-local idx (matches reference)
                    else:
                        neg_id = int(indices[0])           # level-local idx (matches reference)
                    level_a.append(batch_idx)
                    level_p.append(int(pos_id))
                    level_n.append(neg_id)

            if len(level_a) >= 3:                                      # reference's >= 3 gate
                w = 1.0 / len(level_a)                                 # per-level mean
                a_idx += level_a
                p_idx += level_p
                n_idx += level_n
                margins += [margin] * len(level_a)
                weights += [w] * len(level_a)

        if not a_idx:
            return jnp.float32(0.0)

        # Kernel 2: one batched triplet-loss call across all levels (indices, per-triplet
        # margin and 1/T_level weight passed as tiny int/float columns; gathers on device).
        return triplet_total_loss(sim_dev, a_idx, p_idx, n_idx, margins, weights)


if __name__ == "__main__":
    random.seed(0)
    key = jax.random.PRNGKey(0)
    k_text, k_label = jax.random.split(key)

    B, L, D = 2, 12, 32
    text_embeddings = jax.random.normal(k_text, (B, D), jnp.float32)
    label_embeddings = jax.random.normal(k_label, (L, D), jnp.float32)

    # Multi-hot target labels (deterministic), 12 total labels.
    target_labels = jnp.array(
        [[1, 1, 0, 0, 1, 0, 1, 0, 0, 1, 0, 0],
         [0, 1, 1, 0, 0, 1, 0, 1, 1, 0, 0, 0]], dtype=jnp.int32)

    # Synthetic deterministic replacement for level_dict.pt: two hierarchy levels.
    level_dict = {1: [0, 1, 2, 3], 2: [4, 5, 6, 7, 8, 9, 10, 11]}
    margin_list = [0.2, 0.1]

    module = MarginSeparationLossPallas(margin_list, level_dict)
    loss = module.forward(text_embeddings, label_embeddings, target_labels)
    jax.block_until_ready(loss)
    print("KERNEL_OK")
</pallas_src>

<mosaic_0001>
module attributes {stable_mosaic.version = 11 : i64} {
  func.func @_sim_kernel(%arg0: i32, %arg1: i32, %arg2: memref<8x128xf32, #tpu.memory_space<vmem>>, %arg3: memref<128x128xf32, #tpu.memory_space<vmem>>, %arg4: memref<8x128xf32, #tpu.memory_space<vmem>>) attributes {dimension_semantics = [#tpu.dimension_semantics<parallel>, #tpu.dimension_semantics<parallel>], iteration_bounds = array<i64: 1, 1>, scalar_prefetch = 0 : i64, scratch_operands = 0 : i64, tpu.core_type = #tpu.core_type<tc>, window_params = [{transform_indices = @transform_0, window_bounds = array<i64: 8, 128>}, {transform_indices = @transform_1, window_bounds = array<i64: 128, 128>}, {transform_indices = @transform_2, window_bounds = array<i64: 8, 128>}]} {
    %c0 = arith.constant 0 : index
    %c0_0 = arith.constant 0 : index
    %0 = vector.load %arg2[%c0, %c0_0] : memref<8x128xf32, #tpu.memory_space<vmem>>, vector<8x128xf32>
    %c0_1 = arith.constant 0 : index
    %c0_2 = arith.constant 0 : index
    %1 = vector.load %arg3[%c0_1, %c0_2] : memref<128x128xf32, #tpu.memory_space<vmem>>, vector<128x128xf32>
    %2 = arith.mulf %0, %0 : vector<8x128xf32>
    %cst = arith.constant dense<0.000000e+00> : vector<8xf32>
    %3 = vector.multi_reduction <add>, %2, %cst [1] : vector<8x128xf32> to vector<8xf32>
    %4 = vector.shape_cast %3 : vector<8xf32> to vector<8x1xf32>
    %cst_3 = arith.constant 1.000000e-24 : f32
    %5 = vector.broadcast %cst_3 : f32 to vector<8x1xf32>
    %6 = arith.maximumf %4, %5 : vector<8x1xf32>
    %7 = math.rsqrt %6 : vector<8x1xf32>
    %8 = vector.broadcast %7 : vector<8x1xf32> to vector<8x128xf32>
    %9 = arith.mulf %0, %8 : vector<8x128xf32>
    %10 = arith.mulf %1, %1 : vector<128x128xf32>
    %cst_4 = arith.constant dense<0.000000e+00> : vector<128xf32>
    %11 = vector.multi_reduction <add>, %10, %cst_4 [1] : vector<128x128xf32> to vector<128xf32>
    %12 = vector.shape_cast %11 : vector<128xf32> to vector<128x1xf32>
    %cst_5 = arith.constant 1.000000e-24 : f32
    %13 = vector.broadcast %cst_5 : f32 to vector<128x1xf32>
    %14 = arith.maximumf %12, %13 : vector<128x1xf32>
    %15 = math.rsqrt %14 : vector<128x1xf32>
    %16 = vector.broadcast %15 : vector<128x1xf32> to vector<128x128xf32>
    %17 = arith.mulf %1, %16 : vector<128x128xf32>
    %cst_6 = arith.constant dense<0.000000e+00> : vector<8x128xf32>
    %18 = tpu.matmul %9, %17, %cst_6 {dimension_numbers = #tpu.dot_dimension_numbers<[1], [1], [0], [0], [0, 0, 1, 0], [], []>} : vector<8x128xf32>, vector<128x128xf32>, vector<8x128xf32> -> vector<8x128xf32>
    %c0_7 = arith.constant 0 : index
    %c0_8 = arith.constant 0 : index
    %19 = vector.load %arg4[%c0_7, %c0_8] : memref<8x128xf32, #tpu.memory_space<vmem>>, vector<8x128xf32>
    tpu.vector_store %arg4[%c0_7, %c0_8], %18 {strides = array<i32>} : memref<8x128xf32, #tpu.memory_space<vmem>>, vector<8x128xf32>,
    return
  }
  func.func @transform_0(%arg0: i32, %arg1: i32) -> (i32, i32) {
    %c0_i32 = arith.constant 0 : i32
    %c0_i32_0 = arith.constant 0 : i32
    return %arg0, %c0_i32 : i32, i32
  }
  func.func @transform_1(%arg0: i32, %arg1: i32) -> (i32, i32) {
    %c0_i32 = arith.constant 0 : i32
    %c0_i32_0 = arith.constant 0 : i32
    return %arg1, %c0_i32 : i32, i32
  }
  func.func @transform_2(%arg0: i32, %arg1: i32) -> (i32, i32) {
    %c0_i32 = arith.constant 0 : i32
    return %arg0, %arg1 : i32, i32
  }
}

</mosaic_0001>

<llo_original>
// kernel: tpu_custom_call.1
$region0: #{tpu_custom_call.1}
  #allocation0 [shape = 'u32[]', space=smem, size = 0x4, offset = 0x4, fixed_abs, tag = 'smem constant byte address 0x4 - core index']
  #allocation1 [shape = 'u32[72,128]{1,0:T(1,128)}', space=vmem, size = 0x9000, scoped, tag = 'internal scratch']
  %s0 = inlined_call_operand.hbm [shape: f32[8,128], index: 0, kind: input, shape index: {}]
  %s1 = inlined_call_operand.hbm [shape: f32[128,128], index: 1, kind: input, shape index: {}]
  %s2 = inlined_call_operand.hbm [shape: f32[8,128], index: 2, kind: output, shape index: {}]
  %s3 = sld [smem:[#allocation0]]
  $region26: #{tpu_custom_call.1} parent=0
    _
  %s5 = ssub.s32 1, %s3
  %s6 = scalar_select 0, %s5, %s3
  $region1: #{tpu_custom_call.1} parent=0
    #allocation2 [shape = 'u8[4096]{0}', space=vmem, size = 0x1000, scoped, tag = 'input window, operand 0, single buffered']
    #allocation3 [shape = 's32[1]{0}', space=sflag, size = 0x4, scoped, tag = 'scoped memory for tpu_custom_call.1']
    #allocation4 [shape = 's32[1]{0}', space=sflag, size = 0x4, scoped, tag = 'scoped memory for tpu_custom_call.1']
    #allocation5 [shape = 'u8[65536]{0}', space=vmem, size = 0x10000, scoped, tag = 'input window, operand 1, single buffered']
    #allocation6 [shape = 's32[1]{0}', space=sflag, size = 0x4, scoped, tag = 'scoped memory for tpu_custom_call.1']
    #allocation7 [shape = 'u8[4096]{0}', space=vmem, size = 0x1000, scoped, tag = 'output window, operand 0, single buffered']
    %7 = vsyncpa [#allocation3], 0
    %8 = vsyncpa [#allocation6], 0
    %9 = vsyncpa [#allocation4], 0
    // Predicated region
    $region2: #{tpu_custom_call.1} parent=1 // pred_check
      _
    $region3: #{tpu_custom_call.1} parent=1 // pred_check_branch
      %11 = sbr.rel (0) target = $region5
    $region4: #{tpu_custom_call.1} parent=1 // pred_region
      %13 = vsyncadd [#allocation3], 0
      %s15 = sshll.u32 %s0, 4
      %s16 = int_to_ptr.hbm [resolvable:$true] %s15
      %s17 = sshll.u32 [#allocation2], 4
      %s18 = int_to_ptr.vmem [resolvable:$true] %s17
      %20 = dma.hbm_to_vmem [thread:$0]  %s16, 128, %s18, [#allocation3]
    $region5: #{tpu_custom_call.1} parent=1 // pred_fallthru
      _
    // Predicated region
    $region6: #{tpu_custom_call.1} parent=1 // pred_check
      _
    $region7: #{tpu_custom_call.1} parent=1 // pred_check_branch
      %22 = sbr.rel (0) target = $region9
    $region8: #{tpu_custom_call.1} parent=1 // pred_region
      %24 = vsyncadd [#allocation6], 0
      %s25 = sshll.u32 %s1, 4
      %s26 = int_to_ptr.hbm [resolvable:$true] %s25
      %s27 = sshll.u32 [#allocation5], 4
      %s28 = int_to_ptr.vmem [resolvable:$true] %s27
      %33 = dma.hbm_to_vmem [thread:$0]  %s26, 2048, %s28, [#allocation6], 128, 128, 8
    $region9: #{tpu_custom_call.1} parent=1 // pred_fallthru
      _
    // Predicated region
    $region10: #{tpu_custom_call.1} parent=1 // pred_check
      _
    $region11: #{tpu_custom_call.1} parent=1 // pred_check_branch
      %35 = sbr.rel (0) target = $region13
    $region12: #{tpu_custom_call.1} parent=1 // pred_region
      %37 = dma.done [#allocation3], 128
    $region13: #{tpu_custom_call.1} parent=1 // pred_fallthru
      _
    // Predicated region
    $region14: #{tpu_custom_call.1} parent=1 // pred_check
      _
    $region15: #{tpu_custom_call.1} parent=1 // pred_check_branch
      %39 = sbr.rel (0) target = $region17
    $region16: #{tpu_custom_call.1} parent=1 // pred_region
      %41 = dma.done [#allocation6], 2048
    $region17: #{tpu_custom_call.1} parent=1 // pred_fallthru
      _
    %v42 = vld [vmem:[#allocation2] sm:$0xff]
    %v43 = vld [vmem:[#allocation5] sm:$0xff]
    %v44 = vld [vmem:[#allocation5 + $0x8] sm:$0xff]
    %v45 = vld [vmem:[#allocation5 + $0x10] sm:$0xff]
    %v46 = vld [vmem:[#allocation5 + $0x18] sm:$0xff]
    %v47 = vld [vmem:[#allocation5 + $0x20] sm:$0xff]
    %v48 = vld [vmem:[#allocation5 + $0x28] sm:$0xff]
    %v49 = vld [vmem:[#allocation5 + $0x30] sm:$0xff]
    %v50 = vld [vmem:[#allocation5 + $0x38] sm:$0xff]
    %v51 = vld [vmem:[#allocation5 + $0x40] sm:$0xff]
    %v52 = vld [vmem:[#allocation5 + $0x48] sm:$0xff]
    %v53 = vld [vmem:[#allocation5 + $0x50] sm:$0xff]
    %v54 = vld [vmem:[#allocation5 + $0x58] sm:$0xff]
    %v55 = vld [vmem:[#allocation5 + $0x60] sm:$0xff]
    %v56 = vld [vmem:[#allocation5 + $0x68] sm:$0xff]
    %v57 = vld [vmem:[#allocation5 + $0x70] sm:$0xff]
    %v58 = vld [vmem:[#allocation5 + $0x78] sm:$0xff]
    %v59 = vmul.f32 %v42, %v42
    %60 = vadd.xlane.f32.xlu0 %v59
    %v61 = vpop.xlane.xlu0 %60
    %v62 = vmax.f32 %v61, 1e-24
    %v63 = vrsqrt.pop %v62
    %v64 = vmul.f32 %v63, %v62
    %v65 = vmul.f32 %v64, %v63
    %v66 = vmul.f32 0.5, %v65
    %v67 = vsub.f32 1.5, %v66
    %v68 = vmul.f32 %v63, %v67
    %vm69 = vweird.f32 %v62
    %vm70 = vweird.f32 %v63
    %vm71 = vmor %vm69, %vm70
    %v72 = vsel %vm71, %v63, %v68
    %v73 = vmul.f32 %v42, %v72
    %v74 = vmul.f32 %v43, %v43
    %v75 = vmul.f32 %v44, %v44
    %v76 = vmul.f32 %v45, %v45
    %v77 = vmul.f32 %v46, %v46
    %v78 = vmul.f32 %v47, %v47
    %v79 = vmul.f32 %v48, %v48
    %v80 = vmul.f32 %v49, %v49
    %v81 = vmul.f32 %v50, %v50
    %v82 = vmul.f32 %v51, %v51
    %v83 = vmul.f32 %v52, %v52
    %v84 = vmul.f32 %v53, %v53
    %v85 = vmul.f32 %v54, %v54
    %v86 = vmul.f32 %v55, %v55
    %v87 = vmul.f32 %v56, %v56
    %v88 = vmul.f32 %v57, %v57
    %v89 = vmul.f32 %v58, %v58
    %90 = vadd.xlane.f32.xlu0 %v74
    %v91 = vpop.xlane.xlu0 %90
    %92 = vadd.xlane.f32.xlu0 %v75
    %v93 = vpop.xlane.xlu0 %92
    %94 = vadd.xlane.f32.xlu0 %v76
    %v95 = vpop.xlane.xlu0 %94
    %96 = vadd.xlane.f32.xlu0 %v77
    %v97 = vpop.xlane.xlu0 %96
    %98 = vadd.xlane.f32.xlu0 %v78
    %v99 = vpop.xlane.xlu0 %98
    %100 = vadd.xlane.f32.xlu0 %v79
    %v101 = vpop.xlane.xlu0 %100
    %102 = vadd.xlane.f32.xlu0 %v80
    %v103 = vpop.xlane.xlu0 %102
    %104 = vadd.xlane.f32.xlu0 %v81
    %v105 = vpop.xlane.xlu0 %104
    %106 = vadd.xlane.f32.xlu0 %v82
    %v107 = vpop.xlane.xlu0 %106
    %108 = vadd.xlane.f32.xlu0 %v83
    %v109 = vpop.xlane.xlu0 %108
    %110 = vadd.xlane.f32.xlu0 %v84
    %v111 = vpop.xlane.xlu0 %110
    %112 = vadd.xlane.f32.xlu0 %v85
    %v113 = vpop.xlane.xlu0 %112
    %114 = vadd.xlane.f32.xlu0 %v86
    %v115 = vpop.xlane.xlu0 %114
    %116 = vadd.xlane.f32.xlu0 %v87
    %v117 = vpop.xlane.xlu0 %116
    %118 = vadd.xlane.f32.xlu0 %v88
    %v119 = vpop.xlane.xlu0 %118
    %120 = vadd.xlane.f32.xlu0 %v89
    %v121 = vpop.xlane.xlu0 %120
    %v122 = vmax.f32 %v91, 1e-24
    %v123 = vmax.f32 %v93, 1e-24
    %v124 = vmax.f32 %v95, 1e-24
    %v125 = vmax.f32 %v97, 1e-24
    %v126 = vmax.f32 %v99, 1e-24
    %v127 = vmax.f32 %v101, 1e-24
    %v128 = vmax.f32 %v103, 1e-24
    %v129 = vmax.f32 %v105, 1e-24
    %v130 = vmax.f32 %v107, 1e-24
    %v131 = vmax.f32 %v109, 1e-24
    %v132 = vmax.f32 %v111, 1e-24
    %v133 = vmax.f32 %v113, 1e-24
    %v134 = vmax.f32 %v115, 1e-24
    %v135 = vmax.f32 %v117, 1e-24
    %v136 = vmax.f32 %v119, 1e-24
    %v137 = vmax.f32 %v121, 1e-24
    %v138 = vrsqrt.pop %v122
    %v139 = vmul.f32 %v138, %v122
    %v140 = vmul.f32 %v139, %v138
    %v141 = vmul.f32 0.5, %v140
    %v142 = vsub.f32 1.5, %v141
    %v143 = vmul.f32 %v138, %v142
    %vm144 = vweird.f32 %v122
    %vm145 = vweird.f32 %v138
    %vm146 = vmor %vm144, %vm145
    %v147 = vsel %vm146, %v138, %v143
    %v148 = vrsqrt.pop %v123
    %v149 = vmul.f32 %v148, %v123
    %v150 = vmul.f32 %v149, %v148
    %v151 = vmul.f32 0.5, %v150
    %v152 = vsub.f32 1.5, %v151
    %v153 = vmul.f32 %v148, %v152
    %vm154 = vweird.f32 %v123
    %vm155 = vweird.f32 %v148
    %vm156 = vmor %vm154, %vm155
    %v157 = vsel %vm156, %v148, %v153
    %v158 = vrsqrt.pop %v124
    %v159 = vmul.f32 %v158, %v124
    %v160 = vmul.f32 %v159, %v158
    %v161 = vmul.f32 0.5, %v160
    %v162 = vsub.f32 1.5, %v161
    %v163 = vmul.f32 %v158, %v162
    %vm164 = vweird.f32 %v124
    %vm165 = vweird.f32 %v158
    %vm166 = vmor %vm164, %vm165
    %v167 = vsel %vm166, %v158, %v163
    %v168 = vrsqrt.pop %v125
    %v169 = vmul.f32 %v168, %v125
    %v170 = vmul.f32 %v169, %v168
    %v171 = vmul.f32 0.5, %v170
    %v172 = vsub.f32 1.5, %v171
    %v173 = vmul.f32 %v168, %v172
    %vm174 = vweird.f32 %v125
    %vm175 = vweird.f32 %v168
    %vm176 = vmor %vm174, %vm175
    %v177 = vsel %vm176, %v168, %v173
    %v178 = vrsqrt.pop %v126
    %v179 = vmul.f32 %v178, %v126
    %v180 = vmul.f32 %v179, %v178
    %v181 = vmul.f32 0.5, %v180
    %v182 = vsub.f32 1.5, %v181
    %v183 = vmul.f32 %v178, %v182
    %vm184 = vweird.f32 %v126
    %vm185 = vweird.f32 %v178
    %vm186 = vmor %vm184, %vm185
    %v187 = vsel %vm186, %v178, %v183
    %v188 = vrsqrt.pop %v127
    %v189 = vmul.f32 %v188, %v127
    %v190 = vmul.f32 %v189, %v188
    %v191 = vmul.f32 0.5, %v190
    %v192 = vsub.f32 1.5, %v191
    %v193 = vmul.f32 %v188, %v192
    %vm194 = vweird.f32 %v127
    %vm195 = vweird.f32 %v188
    %vm196 = vmor %vm194, %vm195
    %v197 = vsel %vm196, %v188, %v193
    %v198 = vrsqrt.pop %v128
    %v199 = vmul.f32 %v198, %v128
    %v200 = vmul.f32 %v199, %v198
    %v201 = vmul.f32 0.5, %v200
    %v202 = vsub.f32 1.5, %v201
    %v203 = vmul.f32 %v198, %v202
    %vm204 = vweird.f32 %v128
    %vm205 = vweird.f32 %v198
    %vm206 = vmor %vm204, %vm205
    %v207 = vsel %vm206, %v198, %v203
    %v208 = vrsqrt.pop %v129
    %v209 = vmul.f32 %v208, %v129
    %v210 = vmul.f32 %v209, %v208
    %v211 = vmul.f32 0.5, %v210
    %v212 = vsub.f32 1.5, %v211
    %v213 = vmul.f32 %v208, %v212
    %vm214 = vweird.f32 %v129
    %vm215 = vweird.f32 %v208
    %vm216 = vmor %vm214, %vm215
    %v217 = vsel %vm216, %v208, %v213
    %v218 = vrsqrt.pop %v130
    %v219 = vmul.f32 %v218, %v130
    %v220 = vmul.f32 %v219, %v218
    %v221 = vmul.f32 0.5, %v220
    %v222 = vsub.f32 1.5, %v221
    %v223 = vmul.f32 %v218, %v222
    %vm224 = vweird.f32 %v130
    %vm225 = vweird.f32 %v218
    %vm226 = vmor %vm224, %vm225
    %v227 = vsel %vm226, %v218, %v223
    %v228 = vrsqrt.pop %v131
    %v229 = vmul.f32 %v228, %v131
    %v230 = vmul.f32 %v229, %v228
    %v231 = vmul.f32 0.5, %v230
    %v232 = vsub.f32 1.5, %v231
    %v233 = vmul.f32 %v228, %v232
    %vm234 = vweird.f32 %v131
    %vm235 = vweird.f32 %v228
    %vm236 = vmor %vm234, %vm235
    %v237 = vsel %vm236, %v228, %v233
    %v238 = vrsqrt.pop %v132
    %v239 = vmul.f32 %v238, %v132
    %v240 = vmul.f32 %v239, %v238
    %v241 = vmul.f32 0.5, %v240
    %v242 = vsub.f32 1.5, %v241
    %v243 = vmul.f32 %v238, %v242
    %vm244 = vweird.f32 %v132
    %vm245 = vweird.f32 %v238
    %vm246 = vmor %vm244, %vm245
    %v247 = vsel %vm246, %v238, %v243
    %v248 = vrsqrt.pop %v133
    %v249 = vmul.f32 %v248, %v133
    %v250 = vmul.f32 %v249, %v248
    %v251 = vmul.f32 0.5, %v250
    %v252 = vsub.f32 1.5, %v251
    %v253 = vmul.f32 %v248, %v252
    %vm254 = vweird.f32 %v133
    %vm255 = vweird.f32 %v248
    %vm256 = vmor %vm254, %vm255
    %v257 = vsel %vm256, %v248, %v253
    %v258 = vrsqrt.pop %v134
    %v259 = vmul.f32 %v258, %v134
    %v260 = vmul.f32 %v259, %v258
    %v261 = vmul.f32 0.5, %v260
    %v262 = vsub.f32 1.5, %v261
    %v263 = vmul.f32 %v258, %v262
    %vm264 = vweird.f32 %v134
    %vm265 = vweird.f32 %v258
    %vm266 = vmor %vm264, %vm265
    %v267 = vsel %vm266, %v258, %v263
    %v268 = vrsqrt.pop %v135
    %v269 = vmul.f32 %v268, %v135
    %v270 = vmul.f32 %v269, %v268
    %v271 = vmul.f32 0.5, %v270
    %v272 = vsub.f32 1.5, %v271
    %v273 = vmul.f32 %v268, %v272
    %vm274 = vweird.f32 %v135
    %vm275 = vweird.f32 %v268
    %vm276 = vmor %vm274, %vm275
    %v277 = vsel %vm276, %v268, %v273
    %v278 = vrsqrt.pop %v136
    %v279 = vmul.f32 %v278, %v136
    %v280 = vmul.f32 %v279, %v278
    %v281 = vmul.f32 0.5, %v280
    %v282 = vsub.f32 1.5, %v281
    %v283 = vmul.f32 %v278, %v282
    %vm284 = vweird.f32 %v136
    %vm285 = vweird.f32 %v278
    %vm286 = vmor %vm284, %vm285
    %v287 = vsel %vm286, %v278, %v283
    %v288 = vrsqrt.pop %v137
    %v289 = vmul.f32 %v288, %v137
    %v290 = vmul.f32 %v289, %v288
    %v291 = vmul.f32 0.5, %v290
    %v292 = vsub.f32 1.5, %v291
    %v293 = vmul.f32 %v288, %v292
    %vm294 = vweird.f32 %v137
    %vm295 = vweird.f32 %v288
    %vm296 = vmor %vm294, %vm295
    %v297 = vsel %vm296, %v288, %v293
    %v298 = vmul.f32 %v43, %v147
    %v299 = vmul.f32 %v44, %v157
    %v300 = vmul.f32 %v45, %v167
    %v301 = vmul.f32 %v46, %v177
    %v302 = vmul.f32 %v47, %v187
    %v303 = vmul.f32 %v48, %v197
    %v304 = vmul.f32 %v49, %v207
    %v305 = vmul.f32 %v50, %v217
    %v306 = vmul.f32 %v51, %v227
    %v307 = vmul.f32 %v52, %v237
    %v308 = vmul.f32 %v53, %v247
    %v309 = vmul.f32 %v54, %v257
    %v310 = vmul.f32 %v55, %v267
    %v311 = vmul.f32 %v56, %v277
    %v312 = vmul.f32 %v57, %v287
    %v313 = vmul.f32 %v58, %v297
    %314 = vmatpush.xpose.msra.mxu0 %v313
    %315 = vmatpush.xpose.msra.mxu0 %v312
    %316 = vmatpush.xpose.msra.mxu0 %v311
    %317 = vmatpush.xpose.msra.mxu0 %v310
    %318 = vmatpush.xpose.msra.mxu0 %v309
    %319 = vmatpush.xpose.msra.mxu0 %v308
    %320 = vmatpush.xpose.msra.mxu0 %v307
    %321 = vmatpush.xpose.msra.mxu0 %v306
    %322 = vmatpush.xpose.msra.mxu0 %v305
    %323 = vmatpush.xpose.msra.mxu0 %v304
    %324 = vmatpush.xpose.msra.mxu0 %v303
    %325 = vmatpush.xpose.msra.mxu0 %v302
    %326 = vmatpush.xpose.msra.mxu0 %v301
    %327 = vmatpush.xpose.msra.mxu0 %v300
    %328 = vmatpush.xpose.msra.mxu0 %v299
    %329 = vmatpush.xpose.msra.mxu0 %v298
    %330 = vmatmul.f32.gmra.mxu0 %v73
    %v331 = vpop.f32.mrf.mxu0
    %v332 = vadd.f32 0.0, %v331
    %333 = vdwg.mxu0
    %334 = vst [vmem:[#allocation7] sm:$0xff] %v332
    // Predicated region
    $region18: #{tpu_custom_call.1} parent=1 // pred_check
      _
    $region19: #{tpu_custom_call.1} parent=1 // pred_check_branch
      %336 = sbr.rel (0) target = $region21
    $region20: #{tpu_custom_call.1} parent=1 // pred_region
      %338 = vsyncadd [#allocation4], 0
      %s340 = sshll.u32 [#allocation7], 4
      %s341 = int_to_ptr.vmem [resolvable:$true] %s340
      %s342 = sshll.u32 %s2, 4
      %s343 = int_to_ptr.hbm [resolvable:$true] %s342
      %345 = dma.vmem_to_hbm [thread:$0]  %s341, 128, %s343, [#allocation4]
    $region21: #{tpu_custom_call.1} parent=1 // pred_fallthru
      _
    // Predicated region
    $region22: #{tpu_custom_call.1} parent=1 // pred_check
      _
    $region23: #{tpu_custom_call.1} parent=1 // pred_check_branch
      %347 = sbr.rel (0) target = $region25
    $region24: #{tpu_custom_call.1} parent=1 // pred_region
      %349 = dma.done [#allocation4], 128
    $region25: #{tpu_custom_call.1} parent=1 // pred_fallthru
      _
    %350 = vsyncpa [#allocation3], 1
    %351 = vsyncpa [#allocation6], 1
    %352 = vsyncpa [#allocation4], 1

</llo_original>
